<compile_context>
chip_gen: v5e
topology: v5e:2x2
jax: 0.10.0
libtpu: 0.0.40
codegen_flags: <defaults>
</compile_context>

<pallas_src>
import functools

import jax
import jax.numpy as jnp
from jax.experimental import pallas as pl
from jax.experimental.pallas import tpu as pltpu


def _interleave_gate_cols(wf, wb, H):
    """Interleave fwd/bwd 4H gate columns -> 8H with layout [gate][dir][unit]."""
    lead = wf.shape[:-1]
    a = wf.reshape(lead + (4, 1, H))
    b = wb.reshape(lead + (4, 1, H))
    return jnp.concatenate([a, b], axis=-2).reshape(lead + (8 * H,))


def _bilstm_kernel(x_ref, w_ih_ref, w_hh_ref, b_ref, out_ref, xproj_ref):
    S = x_ref.shape[0]
    H8 = w_hh_ref.shape[1]
    H = H8 // 8
    H2, H4, H6 = 2 * H, 4 * H, 6 * H

    # Input projection for all timesteps & both directions: one MXU matmul.
    x = x_ref[...].astype(jnp.float32)
    xproj_ref[...] = (
        jnp.dot(x, w_ih_ref[...], preferred_element_type=jnp.float32) + b_ref[...]
    )

    w_hh = w_hh_ref[...]  # (2H, 8H) block-diagonal recurrent weights (hoisted).

    # Hoisted per-lane constants.
    lane = jax.lax.broadcasted_iota(jnp.int32, (1, H8), 1)
    fwd_cols = (lane % H2) < H                      # forward-direction columns
    # One EUP pass over the whole gate vector: tanh(0.5*x) where a sigmoid is
    # needed (i, f, o), tanh(x) where a tanh is needed (g).
    scale = jnp.where((lane >= H4) & (lane < H6), 1.0, 0.5).astype(jnp.float32)

    def step(t, carry):
        h, c = carry                                # h, c: (1, 2H) = [fwd | bwd]
        tr = S - 1 - t
        x_fwd = xproj_ref[pl.ds(t, 1), :]           # forward reads row t
        x_bwd = xproj_ref[pl.ds(tr, 1), :]          # backward reads row S-1-t
        x_row = jnp.where(fwd_cols, x_fwd, x_bwd)   # (1, 8H)
        gates = x_row + jnp.dot(h, w_hh, preferred_element_type=jnp.float32)

        tg = jnp.tanh(gates * scale)                # single EUP pass, 128 lanes
        i = 0.5 * tg[:, 0:H2] + 0.5                 # sigmoid(i) via tanh trick
        f = 0.5 * tg[:, H2:H4] + 0.5
        g = tg[:, H4:H6]
        o = 0.5 * tg[:, H6:H8] + 0.5

        c_new = f * c + i * g
        h_new = o * jnp.tanh(c_new)                 # (1, 2H) = [h_fwd | h_bwd]

        out_ref[pl.ds(t, 1), pl.ds(0, H)] = h_new[:, 0:H]
        out_ref[pl.ds(tr, 1), pl.ds(H, H)] = h_new[:, H:H2]
        return (h_new, c_new)

    h0 = jnp.zeros((1, H2), jnp.float32)
    c0 = jnp.zeros((1, H2), jnp.float32)
    jax.lax.fori_loop(0, S, step, (h0, c0), unroll=True)


def bilstm_pallas(x, w_ih_comb, w_hh_blk, b_comb):
    """x: (S, E) f32. w_ih_comb: (E, 8H), w_hh_blk: (2H, 8H), b_comb: (1, 8H)."""
    S, _ = x.shape
    H8 = w_ih_comb.shape[1]
    H = H8 // 8
    return pl.pallas_call(
        _bilstm_kernel,
        out_shape=jax.ShapeDtypeStruct((S, 2 * H), jnp.float32),
        scratch_shapes=[pltpu.VMEM((S, H8), jnp.float32)],
    )(x, w_ih_comb, w_hh_blk, b_comb)


def init_params(key, *, num_src_words, src_dim, num_ent_words, ent_dim, seq_size):
    """Deterministic synthetic parameters matching the module's __init__ shapes."""
    assert seq_size % 2 == 0
    H = seq_size // 2
    E = src_dim + ent_dim
    ks = jax.random.split(key, 10)
    u = lambda k, shape: jax.random.uniform(k, shape, jnp.float32, -0.1, 0.1)
    params = {
        "src_embedding": u(ks[0], (num_src_words, src_dim)),
        "ent_embedding": u(ks[1], (num_ent_words, ent_dim)),
        # PyTorch nn.LSTM parameter shapes: weight_ih (4H,E), weight_hh (4H,H), biases (4H,)
        "w_ih_fwd": u(ks[2], (4 * H, E)),
        "w_hh_fwd": u(ks[3], (4 * H, H)),
        "b_ih_fwd": u(ks[4], (4 * H,)),
        "b_hh_fwd": u(ks[5], (4 * H,)),
        "w_ih_bwd": u(ks[6], (4 * H, E)),
        "w_hh_bwd": u(ks[7], (4 * H, H)),
        "b_ih_bwd": u(ks[8], (4 * H,)),
        "b_hh_bwd": u(ks[9], (4 * H,)),
    }
    return params


@jax.jit
def question_encoding_forward(src_seq_s, ent_seq_s, params):
    # Embedding lookups + entrywise concat (glue, plain JAX).
    src_emb = params["src_embedding"][src_seq_s]          # (S, src_dim)
    ent_emb = params["ent_embedding"][ent_seq_s]          # (S, ent_dim)
    x = jnp.concatenate([src_emb, ent_emb], axis=1)       # (S, E)

    H = params["w_hh_fwd"].shape[1]

    # Combined input weights / biases, columns permuted to [gate][dir][unit].
    w_ih_comb = _interleave_gate_cols(params["w_ih_fwd"].T,
                                      params["w_ih_bwd"].T, H)          # (E, 8H)
    b_comb = _interleave_gate_cols(params["b_ih_fwd"] + params["b_hh_fwd"],
                                   params["b_ih_bwd"] + params["b_hh_bwd"],
                                   H)[None, :]                          # (1, 8H)

    # Block-diagonal recurrent weights: [h_fwd | h_bwd] @ w_hh_blk -> both gates.
    whf = params["w_hh_fwd"].T.reshape(H, 4, 1, H)
    whb = params["w_hh_bwd"].T.reshape(H, 4, 1, H)
    z = jnp.zeros_like(whf)
    w_hh_blk = jnp.concatenate(
        [jnp.concatenate([whf, z], axis=2),
         jnp.concatenate([z, whb], axis=2)], axis=0).reshape(2 * H, 8 * H)

    return bilstm_pallas(x, w_ih_comb, w_hh_blk, b_comb)  # (S, 2H)


def reference_forward(src_seq_s, ent_seq_s, params):
    """Pure-JAX reference of the same forward pass (for a sanity check)."""
    src_emb = params["src_embedding"][src_seq_s]
    ent_emb = params["ent_embedding"][ent_seq_s]
    x = jnp.concatenate([src_emb, ent_emb], axis=1)
    H = params["w_hh_fwd"].shape[1]

    def run_dir(w_ih, w_hh, b_ih, b_hh, xs):
        def step(carry, x_t):
            h, c = carry
            gates = x_t @ w_ih.T + b_ih + h @ w_hh.T + b_hh
            i, f, g, o = jnp.split(gates, 4)
            i, f, o = jax.nn.sigmoid(i), jax.nn.sigmoid(f), jax.nn.sigmoid(o)
            g = jnp.tanh(g)
            c = f * c + i * g
            h = o * jnp.tanh(c)
            return (h, c), h
        (_, _), hs = jax.lax.scan(step, (jnp.zeros(H), jnp.zeros(H)), xs)
        return hs

    fwd = run_dir(params["w_ih_fwd"], params["w_hh_fwd"],
                  params["b_ih_fwd"], params["b_hh_fwd"], x)
    bwd = run_dir(params["w_ih_bwd"], params["w_hh_bwd"],
                  params["b_ih_bwd"], params["b_hh_bwd"], x[::-1])[::-1]
    return jnp.concatenate([fwd, bwd], axis=-1)


if __name__ == "__main__":
    # Small, module-consistent shapes.
    S = 8                 # question length
    NUM_SRC_WORDS = 50    # src vocab
    SRC_DIM = 20          # src_embedding.embedding_dim
    NUM_ENT_WORDS = 30    # ent vocab (POS tags)
    ENT_DIM = 12          # flags.ent_embedding_size
    SEQ_SIZE = 32         # flags.sequence_question_encoding_size (even)

    key = jax.random.PRNGKey(0)
    k_params, k_src, k_ent = jax.random.split(key, 3)
    params = init_params(k_params,
                         num_src_words=NUM_SRC_WORDS, src_dim=SRC_DIM,
                         num_ent_words=NUM_ENT_WORDS, ent_dim=ENT_DIM,
                         seq_size=SEQ_SIZE)

    src_seq_s = jax.random.randint(k_src, (S,), 0, NUM_SRC_WORDS, dtype=jnp.int32)
    ent_seq_s = jax.random.randint(k_ent, (S,), 0, NUM_ENT_WORDS, dtype=jnp.int32)

    out = question_encoding_forward(src_seq_s, ent_seq_s, params)
    out = jax.block_until_ready(out)
    assert out.shape == (S, SEQ_SIZE), out.shape

    ref = jax.block_until_ready(reference_forward(src_seq_s, ent_seq_s, params))
    assert jnp.allclose(out, ref, atol=1e-4, rtol=1e-4), \
        float(jnp.max(jnp.abs(out - ref)))

    print("KERNEL_OK")
</pallas_src>

<mosaic_0001>
module attributes {stable_mosaic.version = 11 : i64} {
  func.func @_bilstm_kernel(%arg0: memref<8x32xf32, #tpu.memory_space<vmem>>, %arg1: memref<32x128xf32, #tpu.memory_space<vmem>>, %arg2: memref<32x128xf32, #tpu.memory_space<vmem>>, %arg3: memref<1x128xf32, #tpu.memory_space<vmem>>, %arg4: memref<8x32xf32, #tpu.memory_space<vmem>>, %arg5: memref<8x128xf32, #tpu.memory_space<vmem>>) attributes {dimension_semantics = [], scalar_prefetch = 0 : i64, scratch_operands = 1 : i64, tpu.core_type = #tpu.core_type<tc>} {
    %c0 = arith.constant 0 : index
    %c0_0 = arith.constant 0 : index
    %0 = vector.load %arg0[%c0, %c0_0] : memref<8x32xf32, #tpu.memory_space<vmem>>, vector<8x32xf32>
    %c0_1 = arith.constant 0 : index
    %c0_2 = arith.constant 0 : index
    %1 = vector.load %arg1[%c0_1, %c0_2] : memref<32x128xf32, #tpu.memory_space<vmem>>, vector<32x128xf32>
    %cst = arith.constant dense<0.000000e+00> : vector<8x128xf32>
    %2 = tpu.matmul %0, %1, %cst {dimension_numbers = #tpu.dot_dimension_numbers<[1], [0], [0], [1], [0, 0, 1, 1], [], []>} : vector<8x32xf32>, vector<32x128xf32>, vector<8x128xf32> -> vector<8x128xf32>
    %c0_3 = arith.constant 0 : index
    %c0_4 = arith.constant 0 : index
    %3 = vector.load %arg3[%c0_3, %c0_4] : memref<1x128xf32, #tpu.memory_space<vmem>>, vector<1x128xf32>
    %4 = vector.broadcast %3 : vector<1x128xf32> to vector<8x128xf32>
    %5 = arith.addf %2, %4 : vector<8x128xf32>
    %c0_5 = arith.constant 0 : index
    %c0_6 = arith.constant 0 : index
    %6 = vector.load %arg5[%c0_5, %c0_6] : memref<8x128xf32, #tpu.memory_space<vmem>>, vector<8x128xf32>
    tpu.vector_store %arg5[%c0_5, %c0_6], %5 {strides = array<i32>} : memref<8x128xf32, #tpu.memory_space<vmem>>, vector<8x128xf32>,
    %c0_7 = arith.constant 0 : index
    %c0_8 = arith.constant 0 : index
    %7 = vector.load %arg2[%c0_7, %c0_8] : memref<32x128xf32, #tpu.memory_space<vmem>>, vector<32x128xf32>
    %8 = tpu.iota {dimensions = array<i32: 1>} : vector<1x128xi32>
    %c32_i32 = arith.constant 32 : i32
    %c0_i32 = arith.constant 0 : i32
    %9 = arith.cmpi eq, %c32_i32, %c0_i32 : i32
    %c1_i32 = arith.constant 1 : i32
    %10 = arith.select %9, %c1_i32, %c32_i32 : i32
    %11 = vector.broadcast %10 : i32 to vector<1x128xi32>
    %12 = arith.remsi %8, %11 : vector<1x128xi32>
    %c0_i32_9 = arith.constant 0 : i32
    %13 = vector.broadcast %c0_i32_9 : i32 to vector<1x128xi32>
    %14 = arith.cmpi ne, %12, %13 : vector<1x128xi32>
    %c0_i32_10 = arith.constant 0 : i32
    %15 = vector.broadcast %c0_i32_10 : i32 to vector<1x128xi32>
    %16 = arith.cmpi slt, %12, %15 : vector<1x128xi32>
    %c0_i32_11 = arith.constant 0 : i32
    %17 = arith.cmpi slt, %10, %c0_i32_11 : i32
    %18 = vector.broadcast %17 : i1 to vector<1x128xi1>
    %19 = vector.broadcast %18 : vector<1x128xi1> to vector<1x128xi1>
    %20 = arith.xori %16, %19 : vector<1x128xi1>
    %21 = arith.andi %20, %14 : vector<1x128xi1>
    %22 = vector.broadcast %10 : i32 to vector<1x128xi32>
    %23 = arith.addi %12, %22 : vector<1x128xi32>
    %24 = arith.select %21, %23, %12 : vector<1x128xi1>, vector<1x128xi32>
    %c16_i32 = arith.constant 16 : i32
    %25 = vector.broadcast %c16_i32 : i32 to vector<1x128xi32>
    %26 = arith.cmpi slt, %24, %25 : vector<1x128xi32>
    %c64_i32 = arith.constant 64 : i32
    %27 = vector.broadcast %c64_i32 : i32 to vector<1x128xi32>
    %28 = arith.cmpi sge, %8, %27 : vector<1x128xi32>
    %c96_i32 = arith.constant 96 : i32
    %29 = vector.broadcast %c96_i32 : i32 to vector<1x128xi32>
    %30 = arith.cmpi slt, %8, %29 : vector<1x128xi32>
    %31 = arith.andi %28, %30 : vector<1x128xi1>
    %cst_12 = arith.constant 1.000000e+00 : f32
    %cst_13 = arith.constant 5.000000e-01 : f32
    %32 = vector.broadcast %cst_12 : f32 to vector<1x128xf32>
    %33 = vector.broadcast %cst_13 : f32 to vector<1x128xf32>
    %34 = arith.select %31, %32, %33 : vector<1x128xi1>, vector<1x128xf32>
    %cst_14 = arith.constant 0.000000e+00 : f32
    %35 = vector.broadcast %cst_14 : f32 to vector<1x32xf32>
    %cst_15 = arith.constant 0.000000e+00 : f32
    %36 = vector.broadcast %cst_15 : f32 to vector<1x32xf32>
    %c0_i32_16 = arith.constant 0 : i32
    %c7_i32 = arith.constant 7 : i32
    %37 = arith.subi %c7_i32, %c0_i32_16 : i32
    %38 = arith.index_cast %c0_i32_16 : i32 to index
    %c0_17 = arith.constant 0 : index
    %39 = vector.load %arg5[%38, %c0_17] : memref<8x128xf32, #tpu.memory_space<vmem>>, vector<1x128xf32>
    %40 = arith.index_cast %37 : i32 to index
    %c0_18 = arith.constant 0 : index
    %41 = vector.load %arg5[%40, %c0_18] : memref<8x128xf32, #tpu.memory_space<vmem>>, vector<1x128xf32>
    %42 = arith.select %26, %39, %41 : vector<1x128xi1>, vector<1x128xf32>
    %cst_19 = arith.constant dense<0.000000e+00> : vector<1x128xf32>
    %43 = tpu.matmul %35, %7, %cst_19 {dimension_numbers = #tpu.dot_dimension_numbers<[1], [0], [0], [1], [0, 0, 1, 1], [], []>} : vector<1x32xf32>, vector<32x128xf32>, vector<1x128xf32> -> vector<1x128xf32>
    %44 = arith.addf %42, %43 : vector<1x128xf32>
    %45 = arith.mulf %44, %34 : vector<1x128xf32>
    %46 = math.tanh %45 : vector<1x128xf32>
    %47 = vector.extract_strided_slice %46 {offsets = [0, 0], sizes = [1, 32], strides = [1, 1]} : vector<1x128xf32> to vector<1x32xf32>
    %cst_20 = arith.constant 5.000000e-01 : f32
    %48 = vector.broadcast %cst_20 : f32 to vector<1x32xf32>
    %49 = arith.mulf %48, %47 : vector<1x32xf32>
    %cst_21 = arith.constant 5.000000e-01 : f32
    %50 = vector.broadcast %cst_21 : f32 to vector<1x32xf32>
    %51 = arith.addf %49, %50 : vector<1x32xf32>
    %52 = vector.extract_strided_slice %46 {offsets = [0, 32], sizes = [1, 32], strides = [1, 1]} : vector<1x128xf32> to vector<1x32xf32>
    %cst_22 = arith.constant 5.000000e-01 : f32
    %53 = vector.broadcast %cst_22 : f32 to vector<1x32xf32>
    %54 = arith.mulf %53, %52 : vector<1x32xf32>
    %cst_23 = arith.constant 5.000000e-01 : f32
    %55 = vector.broadcast %cst_23 : f32 to vector<1x32xf32>
    %56 = arith.addf %54, %55 : vector<1x32xf32>
    %57 = vector.extract_strided_slice %46 {offsets = [0, 64], sizes = [1, 32], strides = [1, 1]} : vector<1x128xf32> to vector<1x32xf32>
    %58 = vector.extract_strided_slice %46 {offsets = [0, 96], sizes = [1, 32], strides = [1, 1]} : vector<1x128xf32> to vector<1x32xf32>
    %cst_24 = arith.constant 5.000000e-01 : f32
    %59 = vector.broadcast %cst_24 : f32 to vector<1x32xf32>
    %60 = arith.mulf %59, %58 : vector<1x32xf32>
    %cst_25 = arith.constant 5.000000e-01 : f32
    %61 = vector.broadcast %cst_25 : f32 to vector<1x32xf32>
    %62 = arith.addf %60, %61 : vector<1x32xf32>
    %63 = arith.mulf %56, %36 : vector<1x32xf32>
    %64 = arith.mulf %51, %57 : vector<1x32xf32>
    %65 = arith.addf %63, %64 : vector<1x32xf32>
    %66 = math.tanh %65 : vector<1x32xf32>
    %67 = arith.mulf %62, %66 : vector<1x32xf32>
    %68 = vector.extract_strided_slice %67 {offsets = [0, 0], sizes = [1, 16], strides = [1, 1]} : vector<1x32xf32> to vector<1x16xf32>
    %69 = arith.index_cast %c0_i32_16 : i32 to index
    %c0_26 = arith.constant 0 : index
    %70 = vector.load %arg4[%69, %c0_26] : memref<8x32xf32, #tpu.memory_space<vmem>>, vector<1x16xf32>
    tpu.vector_store %arg4[%69, %c0_26], %68 {strides = array<i32>} : memref<8x32xf32, #tpu.memory_space<vmem>>, vector<1x16xf32>,
    %71 = vector.extract_strided_slice %67 {offsets = [0, 16], sizes = [1, 16], strides = [1, 1]} : vector<1x32xf32> to vector<1x16xf32>
    %72 = arith.index_cast %37 : i32 to index
    %c16 = arith.constant 16 : index
    %73 = vector.load %arg4[%72, %c16] : memref<8x32xf32, #tpu.memory_space<vmem>>, vector<1x16xf32>
    tpu.vector_store %arg4[%72, %c16], %71 {strides = array<i32>} : memref<8x32xf32, #tpu.memory_space<vmem>>, vector<1x16xf32>,
    %c1_i32_27 = arith.constant 1 : i32
    %c7_i32_28 = arith.constant 7 : i32
    %74 = arith.subi %c7_i32_28, %c1_i32_27 : i32
    %75 = arith.index_cast %c1_i32_27 : i32 to index
    %c0_29 = arith.constant 0 : index
    %76 = vector.load %arg5[%75, %c0_29] : memref<8x128xf32, #tpu.memory_space<vmem>>, vector<1x128xf32>
    %77 = arith.index_cast %74 : i32 to index
    %c0_30 = arith.constant 0 : index
    %78 = vector.load %arg5[%77, %c0_30] : memref<8x128xf32, #tpu.memory_space<vmem>>, vector<1x128xf32>
    %79 = arith.select %26, %76, %78 : vector<1x128xi1>, vector<1x128xf32>
    %cst_31 = arith.constant dense<0.000000e+00> : vector<1x128xf32>
    %80 = tpu.matmul %67, %7, %cst_31 {dimension_numbers = #tpu.dot_dimension_numbers<[1], [0], [0], [1], [0, 0, 1, 1], [], []>} : vector<1x32xf32>, vector<32x128xf32>, vector<1x128xf32> -> vector<1x128xf32>
    %81 = arith.addf %79, %80 : vector<1x128xf32>
    %82 = arith.mulf %81, %34 : vector<1x128xf32>
    %83 = math.tanh %82 : vector<1x128xf32>
    %84 = vector.extract_strided_slice %83 {offsets = [0, 0], sizes = [1, 32], strides = [1, 1]} : vector<1x128xf32> to vector<1x32xf32>
    %cst_32 = arith.constant 5.000000e-01 : f32
    %85 = vector.broadcast %cst_32 : f32 to vector<1x32xf32>
    %86 = arith.mulf %85, %84 : vector<1x32xf32>
    %cst_33 = arith.constant 5.000000e-01 : f32
    %87 = vector.broadcast %cst_33 : f32 to vector<1x32xf32>
    %88 = arith.addf %86, %87 : vector<1x32xf32>
    %89 = vector.extract_strided_slice %83 {offsets = [0, 32], sizes = [1, 32], strides = [1, 1]} : vector<1x128xf32> to vector<1x32xf32>
    %cst_34 = arith.constant 5.000000e-01 : f32
    %90 = vector.broadcast %cst_34 : f32 to vector<1x32xf32>
    %91 = arith.mulf %90, %89 : vector<1x32xf32>
    %cst_35 = arith.constant 5.000000e-01 : f32
    %92 = vector.broadcast %cst_35 : f32 to vector<1x32xf32>
    %93 = arith.addf %91, %92 : vector<1x32xf32>
    %94 = vector.extract_strided_slice %83 {offsets = [0, 64], sizes = [1, 32], strides = [1, 1]} : vector<1x128xf32> to vector<1x32xf32>
    %95 = vector.extract_strided_slice %83 {offsets = [0, 96], sizes = [1, 32], strides = [1, 1]} : vector<1x128xf32> to vector<1x32xf32>
    %cst_36 = arith.constant 5.000000e-01 : f32
    %96 = vector.broadcast %cst_36 : f32 to vector<1x32xf32>
    %97 = arith.mulf %96, %95 : vector<1x32xf32>
    %cst_37 = arith.constant 5.000000e-01 : f32
    %98 = vector.broadcast %cst_37 : f32 to vector<1x32xf32>
    %99 = arith.addf %97, %98 : vector<1x32xf32>
    %100 = arith.mulf %93, %65 : vector<1x32xf32>
    %101 = arith.mulf %88, %94 : vector<1x32xf32>
    %102 = arith.addf %100, %101 : vector<1x32xf32>
    %103 = math.tanh %102 : vector<1x32xf32>
    %104 = arith.mulf %99, %103 : vector<1x32xf32>
    %105 = vector.extract_strided_slice %104 {offsets = [0, 0], sizes = [1, 16], strides = [1, 1]} : vector<1x32xf32> to vector<1x16xf32>
    %106 = arith.index_cast %c1_i32_27 : i32 to index
    %c0_38 = arith.constant 0 : index
    %107 = vector.load %arg4[%106, %c0_38] : memref<8x32xf32, #tpu.memory_space<vmem>>, vector<1x16xf32>
    tpu.vector_store %arg4[%106, %c0_38], %105 {strides = array<i32>} : memref<8x32xf32, #tpu.memory_space<vmem>>, vector<1x16xf32>,
    %108 = vector.extract_strided_slice %104 {offsets = [0, 16], sizes = [1, 16], strides = [1, 1]} : vector<1x32xf32> to vector<1x16xf32>
    %109 = arith.index_cast %74 : i32 to index
    %c16_39 = arith.constant 16 : index
    %110 = vector.load %arg4[%109, %c16_39] : memref<8x32xf32, #tpu.memory_space<vmem>>, vector<1x16xf32>
    tpu.vector_store %arg4[%109, %c16_39], %108 {strides = array<i32>} : memref<8x32xf32, #tpu.memory_space<vmem>>, vector<1x16xf32>,
    %c2_i32 = arith.constant 2 : i32
    %c7_i32_40 = arith.constant 7 : i32
    %111 = arith.subi %c7_i32_40, %c2_i32 : i32
    %112 = arith.index_cast %c2_i32 : i32 to index
    %c0_41 = arith.constant 0 : index
    %113 = vector.load %arg5[%112, %c0_41] : memref<8x128xf32, #tpu.memory_space<vmem>>, vector<1x128xf32>
    %114 = arith.index_cast %111 : i32 to index
    %c0_42 = arith.constant 0 : index
    %115 = vector.load %arg5[%114, %c0_42] : memref<8x128xf32, #tpu.memory_space<vmem>>, vector<1x128xf32>
    %116 = arith.select %26, %113, %115 : vector<1x128xi1>, vector<1x128xf32>
    %cst_43 = arith.constant dense<0.000000e+00> : vector<1x128xf32>
    %117 = tpu.matmul %104, %7, %cst_43 {dimension_numbers = #tpu.dot_dimension_numbers<[1], [0], [0], [1], [0, 0, 1, 1], [], []>} : vector<1x32xf32>, vector<32x128xf32>, vector<1x128xf32> -> vector<1x128xf32>
    %118 = arith.addf %116, %117 : vector<1x128xf32>
    %119 = arith.mulf %118, %34 : vector<1x128xf32>
    %120 = math.tanh %119 : vector<1x128xf32>
    %121 = vector.extract_strided_slice %120 {offsets = [0, 0], sizes = [1, 32], strides = [1, 1]} : vector<1x128xf32> to vector<1x32xf32>
    %cst_44 = arith.constant 5.000000e-01 : f32
    %122 = vector.broadcast %cst_44 : f32 to vector<1x32xf32>
    %123 = arith.mulf %122, %121 : vector<1x32xf32>
    %cst_45 = arith.constant 5.000000e-01 : f32
    %124 = vector.broadcast %cst_45 : f32 to vector<1x32xf32>
    %125 = arith.addf %123, %124 : vector<1x32xf32>
    %126 = vector.extract_strided_slice %120 {offsets = [0, 32], sizes = [1, 32], strides = [1, 1]} : vector<1x128xf32> to vector<1x32xf32>
    %cst_46 = arith.constant 5.000000e-01 : f32
    %127 = vector.broadcast %cst_46 : f32 to vector<1x32xf32>
    %128 = arith.mulf %127, %126 : vector<1x32xf32>
    %cst_47 = arith.constant 5.000000e-01 : f32
    %129 = vector.broadcast %cst_47 : f32 to vector<1x32xf32>
    %130 = arith.addf %128, %129 : vector<1x32xf32>
    %131 = vector.extract_strided_slice %120 {offsets = [0, 64], sizes = [1, 32], strides = [1, 1]} : vector<1x128xf32> to vector<1x32xf32>
    %132 = vector.extract_strided_slice %120 {offsets = [0, 96], sizes = [1, 32], strides = [1, 1]} : vector<1x128xf32> to vector<1x32xf32>
    %cst_48 = arith.constant 5.000000e-01 : f32
    %133 = vector.broadcast %cst_48 : f32 to vector<1x32xf32>
    %134 = arith.mulf %133, %132 : vector<1x32xf32>
    %cst_49 = arith.constant 5.000000e-01 : f32
    %135 = vector.broadcast %cst_49 : f32 to vector<1x32xf32>
    %136 = arith.addf %134, %135 : vector<1x32xf32>
    %137 = arith.mulf %130, %102 : vector<1x32xf32>
    %138 = arith.mulf %125, %131 : vector<1x32xf32>
    %139 = arith.addf %137, %138 : vector<1x32xf32>
    %140 = math.tanh %139 : vector<1x32xf32>
    %141 = arith.mulf %136, %140 : vector<1x32xf32>
    %142 = vector.extract_strided_slice %141 {offsets = [0, 0], sizes = [1, 16], strides = [1, 1]} : vector<1x32xf32> to vector<1x16xf32>
    %143 = arith.index_cast %c2_i32 : i32 to index
    %c0_50 = arith.constant 0 : index
    %144 = vector.load %arg4[%143, %c0_50] : memref<8x32xf32, #tpu.memory_space<vmem>>, vector<1x16xf32>
    tpu.vector_store %arg4[%143, %c0_50], %142 {strides = array<i32>} : memref<8x32xf32, #tpu.memory_space<vmem>>, vector<1x16xf32>,
    %145 = vector.extract_strided_slice %141 {offsets = [0, 16], sizes = [1, 16], strides = [1, 1]} : vector<1x32xf32> to vector<1x16xf32>
    %146 = arith.index_cast %111 : i32 to index
    %c16_51 = arith.constant 16 : index
    %147 = vector.load %arg4[%146, %c16_51] : memref<8x32xf32, #tpu.memory_space<vmem>>, vector<1x16xf32>
    tpu.vector_store %arg4[%146, %c16_51], %145 {strides = array<i32>} : memref<8x32xf32, #tpu.memory_space<vmem>>, vector<1x16xf32>,
    %c3_i32 = arith.constant 3 : i32
    %c7_i32_52 = arith.constant 7 : i32
    %148 = arith.subi %c7_i32_52, %c3_i32 : i32
    %149 = arith.index_cast %c3_i32 : i32 to index
    %c0_53 = arith.constant 0 : index
    %150 = vector.load %arg5[%149, %c0_53] : memref<8x128xf32, #tpu.memory_space<vmem>>, vector<1x128xf32>
    %151 = arith.index_cast %148 : i32 to index
    %c0_54 = arith.constant 0 : index
    %152 = vector.load %arg5[%151, %c0_54] : memref<8x128xf32, #tpu.memory_space<vmem>>, vector<1x128xf32>
    %153 = arith.select %26, %150, %152 : vector<1x128xi1>, vector<1x128xf32>
    %cst_55 = arith.constant dense<0.000000e+00> : vector<1x128xf32>
    %154 = tpu.matmul %141, %7, %cst_55 {dimension_numbers = #tpu.dot_dimension_numbers<[1], [0], [0], [1], [0, 0, 1, 1], [], []>} : vector<1x32xf32>, vector<32x128xf32>, vector<1x128xf32> -> vector<1x128xf32>
    %155 = arith.addf %153, %154 : vector<1x128xf32>
    %156 = arith.mulf %155, %34 : vector<1x128xf32>
    %157 = math.tanh %156 : vector<1x128xf32>
    %158 = vector.extract_strided_slice %157 {offsets = [0, 0], sizes = [1, 32], strides = [1, 1]} : vector<1x128xf32> to vector<1x32xf32>
    %cst_56 = arith.constant 5.000000e-01 : f32
    %159 = vector.broadcast %cst_56 : f32 to vector<1x32xf32>
    %160 = arith.mulf %159, %158 : vector<1x32xf32>
    %cst_57 = arith.constant 5.000000e-01 : f32
    %161 = vector.broadcast %cst_57 : f32 to vector<1x32xf32>
    %162 = arith.addf %160, %161 : vector<1x32xf32>
    %163 = vector.extract_strided_slice %157 {offsets = [0, 32], sizes = [1, 32], strides = [1, 1]} : vector<1x128xf32> to vector<1x32xf32>
    %cst_58 = arith.constant 5.000000e-01 : f32
    %164 = vector.broadcast %cst_58 : f32 to vector<1x32xf32>
    %165 = arith.mulf %164, %163 : vector<1x32xf32>
    %cst_59 = arith.constant 5.000000e-01 : f32
    %166 = vector.broadcast %cst_59 : f32 to vector<1x32xf32>
    %167 = arith.addf %165, %166 : vector<1x32xf32>
    %168 = vector.extract_strided_slice %157 {offsets = [0, 64], sizes = [1, 32], strides = [1, 1]} : vector<1x128xf32> to vector<1x32xf32>
    %169 = vector.extract_strided_slice %157 {offsets = [0, 96], sizes = [1, 32], strides = [1, 1]} : vector<1x128xf32> to vector<1x32xf32>
    %cst_60 = arith.constant 5.000000e-01 : f32
    %170 = vector.broadcast %cst_60 : f32 to vector<1x32xf32>
    %171 = arith.mulf %170, %169 : vector<1x32xf32>
    %cst_61 = arith.constant 5.000000e-01 : f32
    %172 = vector.broadcast %cst_61 : f32 to vector<1x32xf32>
    %173 = arith.addf %171, %172 : vector<1x32xf32>
    %174 = arith.mulf %167, %139 : vector<1x32xf32>
    %175 = arith.mulf %162, %168 : vector<1x32xf32>
    %176 = arith.addf %174, %175 : vector<1x32xf32>
    %177 = math.tanh %176 : vector<1x32xf32>
    %178 = arith.mulf %173, %177 : vector<1x32xf32>
    %179 = vector.extract_strided_slice %178 {offsets = [0, 0], sizes = [1, 16], strides = [1, 1]} : vector<1x32xf32> to vector<1x16xf32>
    %180 = arith.index_cast %c3_i32 : i32 to index
    %c0_62 = arith.constant 0 : index
    %181 = vector.load %arg4[%180, %c0_62] : memref<8x32xf32, #tpu.memory_space<vmem>>, vector<1x16xf32>
    tpu.vector_store %arg4[%180, %c0_62], %179 {strides = array<i32>} : memref<8x32xf32, #tpu.memory_space<vmem>>, vector<1x16xf32>,
    %182 = vector.extract_strided_slice %178 {offsets = [0, 16], sizes = [1, 16], strides = [1, 1]} : vector<1x32xf32> to vector<1x16xf32>
    %183 = arith.index_cast %148 : i32 to index
    %c16_63 = arith.constant 16 : index
    %184 = vector.load %arg4[%183, %c16_63] : memref<8x32xf32, #tpu.memory_space<vmem>>, vector<1x16xf32>
    tpu.vector_store %arg4[%183, %c16_63], %182 {strides = array<i32>} : memref<8x32xf32, #tpu.memory_space<vmem>>, vector<1x16xf32>,
    %c4_i32 = arith.constant 4 : i32
    %c7_i32_64 = arith.constant 7 : i32
    %185 = arith.subi %c7_i32_64, %c4_i32 : i32
    %186 = arith.index_cast %c4_i32 : i32 to index
    %c0_65 = arith.constant 0 : index
    %187 = vector.load %arg5[%186, %c0_65] : memref<8x128xf32, #tpu.memory_space<vmem>>, vector<1x128xf32>
    %188 = arith.index_cast %185 : i32 to index
    %c0_66 = arith.constant 0 : index
    %189 = vector.load %arg5[%188, %c0_66] : memref<8x128xf32, #tpu.memory_space<vmem>>, vector<1x128xf32>
    %190 = arith.select %26, %187, %189 : vector<1x128xi1>, vector<1x128xf32>
    %cst_67 = arith.constant dense<0.000000e+00> : vector<1x128xf32>
    %191 = tpu.matmul %178, %7, %cst_67 {dimension_numbers = #tpu.dot_dimension_numbers<[1], [0], [0], [1], [0, 0, 1, 1], [], []>} : vector<1x32xf32>, vector<32x128xf32>, vector<1x128xf32> -> vector<1x128xf32>
    %192 = arith.addf %190, %191 : vector<1x128xf32>
    %193 = arith.mulf %192, %34 : vector<1x128xf32>
    %194 = math.tanh %193 : vector<1x128xf32>
    %195 = vector.extract_strided_slice %194 {offsets = [0, 0], sizes = [1, 32], strides = [1, 1]} : vector<1x128xf32> to vector<1x32xf32>
    %cst_68 = arith.constant 5.000000e-01 : f32
    %196 = vector.broadcast %cst_68 : f32 to vector<1x32xf32>
    %197 = arith.mulf %196, %195 : vector<1x32xf32>
    %cst_69 = arith.constant 5.000000e-01 : f32
    %198 = vector.broadcast %cst_69 : f32 to vector<1x32xf32>
    %199 = arith.addf %197, %198 : vector<1x32xf32>
    %200 = vector.extract_strided_slice %194 {offsets = [0, 32], sizes = [1, 32], strides = [1, 1]} : vector<1x128xf32> to vector<1x32xf32>
    %cst_70 = arith.constant 5.000000e-01 : f32
    %201 = vector.broadcast %cst_70 : f32 to vector<1x32xf32>
    %202 = arith.mulf %201, %200 : vector<1x32xf32>
    %cst_71 = arith.constant 5.000000e-01 : f32
    %203 = vector.broadcast %cst_71 : f32 to vector<1x32xf32>
    %204 = arith.addf %202, %203 : vector<1x32xf32>
    %205 = vector.extract_strided_slice %194 {offsets = [0, 64], sizes = [1, 32], strides = [1, 1]} : vector<1x128xf32> to vector<1x32xf32>
    %206 = vector.extract_strided_slice %194 {offsets = [0, 96], sizes = [1, 32], strides = [1, 1]} : vector<1x128xf32> to vector<1x32xf32>
    %cst_72 = arith.constant 5.000000e-01 : f32
    %207 = vector.broadcast %cst_72 : f32 to vector<1x32xf32>
    %208 = arith.mulf %207, %206 : vector<1x32xf32>
    %cst_73 = arith.constant 5.000000e-01 : f32
    %209 = vector.broadcast %cst_73 : f32 to vector<1x32xf32>
    %210 = arith.addf %208, %209 : vector<1x32xf32>
    %211 = arith.mulf %204, %176 : vector<1x32xf32>
    %212 = arith.mulf %199, %205 : vector<1x32xf32>
    %213 = arith.addf %211, %212 : vector<1x32xf32>
    %214 = math.tanh %213 : vector<1x32xf32>
    %215 = arith.mulf %210, %214 : vector<1x32xf32>
    %216 = vector.extract_strided_slice %215 {offsets = [0, 0], sizes = [1, 16], strides = [1, 1]} : vector<1x32xf32> to vector<1x16xf32>
    %217 = arith.index_cast %c4_i32 : i32 to index
    %c0_74 = arith.constant 0 : index
    %218 = vector.load %arg4[%217, %c0_74] : memref<8x32xf32, #tpu.memory_space<vmem>>, vector<1x16xf32>
    tpu.vector_store %arg4[%217, %c0_74], %216 {strides = array<i32>} : memref<8x32xf32, #tpu.memory_space<vmem>>, vector<1x16xf32>,
    %219 = vector.extract_strided_slice %215 {offsets = [0, 16], sizes = [1, 16], strides = [1, 1]} : vector<1x32xf32> to vector<1x16xf32>
    %220 = arith.index_cast %185 : i32 to index
    %c16_75 = arith.constant 16 : index
    %221 = vector.load %arg4[%220, %c16_75] : memref<8x32xf32, #tpu.memory_space<vmem>>, vector<1x16xf32>
    tpu.vector_store %arg4[%220, %c16_75], %219 {strides = array<i32>} : memref<8x32xf32, #tpu.memory_space<vmem>>, vector<1x16xf32>,
    %c5_i32 = arith.constant 5 : i32
    %c7_i32_76 = arith.constant 7 : i32
    %222 = arith.subi %c7_i32_76, %c5_i32 : i32
    %223 = arith.index_cast %c5_i32 : i32 to index
    %c0_77 = arith.constant 0 : index
    %224 = vector.load %arg5[%223, %c0_77] : memref<8x128xf32, #tpu.memory_space<vmem>>, vector<1x128xf32>
    %225 = arith.index_cast %222 : i32 to index
    %c0_78 = arith.constant 0 : index
    %226 = vector.load %arg5[%225, %c0_78] : memref<8x128xf32, #tpu.memory_space<vmem>>, vector<1x128xf32>
    %227 = arith.select %26, %224, %226 : vector<1x128xi1>, vector<1x128xf32>
    %cst_79 = arith.constant dense<0.000000e+00> : vector<1x128xf32>
    %228 = tpu.matmul %215, %7, %cst_79 {dimension_numbers = #tpu.dot_dimension_numbers<[1], [0], [0], [1], [0, 0, 1, 1], [], []>} : vector<1x32xf32>, vector<32x128xf32>, vector<1x128xf32> -> vector<1x128xf32>
    %229 = arith.addf %227, %228 : vector<1x128xf32>
    %230 = arith.mulf %229, %34 : vector<1x128xf32>
    %231 = math.tanh %230 : vector<1x128xf32>
    %232 = vector.extract_strided_slice %231 {offsets = [0, 0], sizes = [1, 32], strides = [1, 1]} : vector<1x128xf32> to vector<1x32xf32>
    %cst_80 = arith.constant 5.000000e-01 : f32
    %233 = vector.broadcast %cst_80 : f32 to vector<1x32xf32>
    %234 = arith.mulf %233, %232 : vector<1x32xf32>
    %cst_81 = arith.constant 5.000000e-01 : f32
    %235 = vector.broadcast %cst_81 : f32 to vector<1x32xf32>
    %236 = arith.addf %234, %235 : vector<1x32xf32>
    %237 = vector.extract_strided_slice %231 {offsets = [0, 32], sizes = [1, 32], strides = [1, 1]} : vector<1x128xf32> to vector<1x32xf32>
    %cst_82 = arith.constant 5.000000e-01 : f32
    %238 = vector.broadcast %cst_82 : f32 to vector<1x32xf32>
    %239 = arith.mulf %238, %237 : vector<1x32xf32>
    %cst_83 = arith.constant 5.000000e-01 : f32
    %240 = vector.broadcast %cst_83 : f32 to vector<1x32xf32>
    %241 = arith.addf %239, %240 : vector<1x32xf32>
    %242 = vector.extract_strided_slice %231 {offsets = [0, 64], sizes = [1, 32], strides = [1, 1]} : vector<1x128xf32> to vector<1x32xf32>
    %243 = vector.extract_strided_slice %231 {offsets = [0, 96], sizes = [1, 32], strides = [1, 1]} : vector<1x128xf32> to vector<1x32xf32>
    %cst_84 = arith.constant 5.000000e-01 : f32
    %244 = vector.broadcast %cst_84 : f32 to vector<1x32xf32>
    %245 = arith.mulf %244, %243 : vector<1x32xf32>
    %cst_85 = arith.constant 5.000000e-01 : f32
    %246 = vector.broadcast %cst_85 : f32 to vector<1x32xf32>
    %247 = arith.addf %245, %246 : vector<1x32xf32>
    %248 = arith.mulf %241, %213 : vector<1x32xf32>
    %249 = arith.mulf %236, %242 : vector<1x32xf32>
    %250 = arith.addf %248, %249 : vector<1x32xf32>
    %251 = math.tanh %250 : vector<1x32xf32>
    %252 = arith.mulf %247, %251 : vector<1x32xf32>
    %253 = vector.extract_strided_slice %252 {offsets = [0, 0], sizes = [1, 16], strides = [1, 1]} : vector<1x32xf32> to vector<1x16xf32>
    %254 = arith.index_cast %c5_i32 : i32 to index
    %c0_86 = arith.constant 0 : index
    %255 = vector.load %arg4[%254, %c0_86] : memref<8x32xf32, #tpu.memory_space<vmem>>, vector<1x16xf32>
    tpu.vector_store %arg4[%254, %c0_86], %253 {strides = array<i32>} : memref<8x32xf32, #tpu.memory_space<vmem>>, vector<1x16xf32>,
    %256 = vector.extract_strided_slice %252 {offsets = [0, 16], sizes = [1, 16], strides = [1, 1]} : vector<1x32xf32> to vector<1x16xf32>
    %257 = arith.index_cast %222 : i32 to index
    %c16_87 = arith.constant 16 : index
    %258 = vector.load %arg4[%257, %c16_87] : memref<8x32xf32, #tpu.memory_space<vmem>>, vector<1x16xf32>
    tpu.vector_store %arg4[%257, %c16_87], %256 {strides = array<i32>} : memref<8x32xf32, #tpu.memory_space<vmem>>, vector<1x16xf32>,
    %c6_i32 = arith.constant 6 : i32
    %c7_i32_88 = arith.constant 7 : i32
    %259 = arith.subi %c7_i32_88, %c6_i32 : i32
    %260 = arith.index_cast %c6_i32 : i32 to index
    %c0_89 = arith.constant 0 : index
    %261 = vector.load %arg5[%260, %c0_89] : memref<8x128xf32, #tpu.memory_space<vmem>>, vector<1x128xf32>
    %262 = arith.index_cast %259 : i32 to index
    %c0_90 = arith.constant 0 : index
    %263 = vector.load %arg5[%262, %c0_90] : memref<8x128xf32, #tpu.memory_space<vmem>>, vector<1x128xf32>
    %264 = arith.select %26, %261, %263 : vector<1x128xi1>, vector<1x128xf32>
    %cst_91 = arith.constant dense<0.000000e+00> : vector<1x128xf32>
    %265 = tpu.matmul %252, %7, %cst_91 {dimension_numbers = #tpu.dot_dimension_numbers<[1], [0], [0], [1], [0, 0, 1, 1], [], []>} : vector<1x32xf32>, vector<32x128xf32>, vector<1x128xf32> -> vector<1x128xf32>
    %266 = arith.addf %264, %265 : vector<1x128xf32>
    %267 = arith.mulf %266, %34 : vector<1x128xf32>
    %268 = math.tanh %267 : vector<1x128xf32>
    %269 = vector.extract_strided_slice %268 {offsets = [0, 0], sizes = [1, 32], strides = [1, 1]} : vector<1x128xf32> to vector<1x32xf32>
    %cst_92 = arith.constant 5.000000e-01 : f32
    %270 = vector.broadcast %cst_92 : f32 to vector<1x32xf32>
    %271 = arith.mulf %270, %269 : vector<1x32xf32>
    %cst_93 = arith.constant 5.000000e-01 : f32
    %272 = vector.broadcast %cst_93 : f32 to vector<1x32xf32>
    %273 = arith.addf %271, %272 : vector<1x32xf32>
    %274 = vector.extract_strided_slice %268 {offsets = [0, 32], sizes = [1, 32], strides = [1, 1]} : vector<1x128xf32> to vector<1x32xf32>
    %cst_94 = arith.constant 5.000000e-01 : f32
    %275 = vector.broadcast %cst_94 : f32 to vector<1x32xf32>
    %276 = arith.mulf %275, %274 : vector<1x32xf32>
    %cst_95 = arith.constant 5.000000e-01 : f32
    %277 = vector.broadcast %cst_95 : f32 to vector<1x32xf32>
    %278 = arith.addf %276, %277 : vector<1x32xf32>
    %279 = vector.extract_strided_slice %268 {offsets = [0, 64], sizes = [1, 32], strides = [1, 1]} : vector<1x128xf32> to vector<1x32xf32>
    %280 = vector.extract_strided_slice %268 {offsets = [0, 96], sizes = [1, 32], strides = [1, 1]} : vector<1x128xf32> to vector<1x32xf32>
    %cst_96 = arith.constant 5.000000e-01 : f32
    %281 = vector.broadcast %cst_96 : f32 to vector<1x32xf32>
    %282 = arith.mulf %281, %280 : vector<1x32xf32>
    %cst_97 = arith.constant 5.000000e-01 : f32
    %283 = vector.broadcast %cst_97 : f32 to vector<1x32xf32>
    %284 = arith.addf %282, %283 : vector<1x32xf32>
    %285 = arith.mulf %278, %250 : vector<1x32xf32>
    %286 = arith.mulf %273, %279 : vector<1x32xf32>
    %287 = arith.addf %285, %286 : vector<1x32xf32>
    %288 = math.tanh %287 : vector<1x32xf32>
    %289 = arith.mulf %284, %288 : vector<1x32xf32>
    %290 = vector.extract_strided_slice %289 {offsets = [0, 0], sizes = [1, 16], strides = [1, 1]} : vector<1x32xf32> to vector<1x16xf32>
    %291 = arith.index_cast %c6_i32 : i32 to index
    %c0_98 = arith.constant 0 : index
    %292 = vector.load %arg4[%291, %c0_98] : memref<8x32xf32, #tpu.memory_space<vmem>>, vector<1x16xf32>
    tpu.vector_store %arg4[%291, %c0_98], %290 {strides = array<i32>} : memref<8x32xf32, #tpu.memory_space<vmem>>, vector<1x16xf32>,
    %293 = vector.extract_strided_slice %289 {offsets = [0, 16], sizes = [1, 16], strides = [1, 1]} : vector<1x32xf32> to vector<1x16xf32>
    %294 = arith.index_cast %259 : i32 to index
    %c16_99 = arith.constant 16 : index
    %295 = vector.load %arg4[%294, %c16_99] : memref<8x32xf32, #tpu.memory_space<vmem>>, vector<1x16xf32>
    tpu.vector_store %arg4[%294, %c16_99], %293 {strides = array<i32>} : memref<8x32xf32, #tpu.memory_space<vmem>>, vector<1x16xf32>,
    %c7_i32_100 = arith.constant 7 : i32
    %c7_i32_101 = arith.constant 7 : i32
    %296 = arith.subi %c7_i32_101, %c7_i32_100 : i32
    %297 = arith.index_cast %c7_i32_100 : i32 to index
    %c0_102 = arith.constant 0 : index
    %298 = vector.load %arg5[%297, %c0_102] : memref<8x128xf32, #tpu.memory_space<vmem>>, vector<1x128xf32>
    %299 = arith.index_cast %296 : i32 to index
    %c0_103 = arith.constant 0 : index
    %300 = vector.load %arg5[%299, %c0_103] : memref<8x128xf32, #tpu.memory_space<vmem>>, vector<1x128xf32>
    %301 = arith.select %26, %298, %300 : vector<1x128xi1>, vector<1x128xf32>
    %cst_104 = arith.constant dense<0.000000e+00> : vector<1x128xf32>
    %302 = tpu.matmul %289, %7, %cst_104 {dimension_numbers = #tpu.dot_dimension_numbers<[1], [0], [0], [1], [0, 0, 1, 1], [], []>} : vector<1x32xf32>, vector<32x128xf32>, vector<1x128xf32> -> vector<1x128xf32>
    %303 = arith.addf %301, %302 : vector<1x128xf32>
    %304 = arith.mulf %303, %34 : vector<1x128xf32>
    %305 = math.tanh %304 : vector<1x128xf32>
    %306 = vector.extract_strided_slice %305 {offsets = [0, 0], sizes = [1, 32], strides = [1, 1]} : vector<1x128xf32> to vector<1x32xf32>
    %cst_105 = arith.constant 5.000000e-01 : f32
    %307 = vector.broadcast %cst_105 : f32 to vector<1x32xf32>
    %308 = arith.mulf %307, %306 : vector<1x32xf32>
    %cst_106 = arith.constant 5.000000e-01 : f32
    %309 = vector.broadcast %cst_106 : f32 to vector<1x32xf32>
    %310 = arith.addf %308, %309 : vector<1x32xf32>
    %311 = vector.extract_strided_slice %305 {offsets = [0, 32], sizes = [1, 32], strides = [1, 1]} : vector<1x128xf32> to vector<1x32xf32>
    %cst_107 = arith.constant 5.000000e-01 : f32
    %312 = vector.broadcast %cst_107 : f32 to vector<1x32xf32>
    %313 = arith.mulf %312, %311 : vector<1x32xf32>
    %cst_108 = arith.constant 5.000000e-01 : f32
    %314 = vector.broadcast %cst_108 : f32 to vector<1x32xf32>
    %315 = arith.addf %313, %314 : vector<1x32xf32>
    %316 = vector.extract_strided_slice %305 {offsets = [0, 64], sizes = [1, 32], strides = [1, 1]} : vector<1x128xf32> to vector<1x32xf32>
    %317 = vector.extract_strided_slice %305 {offsets = [0, 96], sizes = [1, 32], strides = [1, 1]} : vector<1x128xf32> to vector<1x32xf32>
    %cst_109 = arith.constant 5.000000e-01 : f32
    %318 = vector.broadcast %cst_109 : f32 to vector<1x32xf32>
    %319 = arith.mulf %318, %317 : vector<1x32xf32>
    %cst_110 = arith.constant 5.000000e-01 : f32
    %320 = vector.broadcast %cst_110 : f32 to vector<1x32xf32>
    %321 = arith.addf %319, %320 : vector<1x32xf32>
    %322 = arith.mulf %315, %287 : vector<1x32xf32>
    %323 = arith.mulf %310, %316 : vector<1x32xf32>
    %324 = arith.addf %322, %323 : vector<1x32xf32>
    %325 = math.tanh %324 : vector<1x32xf32>
    %326 = arith.mulf %321, %325 : vector<1x32xf32>
    %327 = vector.extract_strided_slice %326 {offsets = [0, 0], sizes = [1, 16], strides = [1, 1]} : vector<1x32xf32> to vector<1x16xf32>
    %328 = arith.index_cast %c7_i32_100 : i32 to index
    %c0_111 = arith.constant 0 : index
    %329 = vector.load %arg4[%328, %c0_111] : memref<8x32xf32, #tpu.memory_space<vmem>>, vector<1x16xf32>
    tpu.vector_store %arg4[%328, %c0_111], %327 {strides = array<i32>} : memref<8x32xf32, #tpu.memory_space<vmem>>, vector<1x16xf32>,
    %330 = vector.extract_strided_slice %326 {offsets = [0, 16], sizes = [1, 16], strides = [1, 1]} : vector<1x32xf32> to vector<1x16xf32>
    %331 = arith.index_cast %296 : i32 to index
    %c16_112 = arith.constant 16 : index
    %332 = vector.load %arg4[%331, %c16_112] : memref<8x32xf32, #tpu.memory_space<vmem>>, vector<1x16xf32>
    tpu.vector_store %arg4[%331, %c16_112], %330 {strides = array<i32>} : memref<8x32xf32, #tpu.memory_space<vmem>>, vector<1x16xf32>,
    %c8_i32 = arith.constant 8 : i32
    return
  }
}

</mosaic_0001>

<llo_original>
// kernel: question_encoding_forward.1
$region0: #{question_encoding_forward.1}
  #allocation0 [shape = 'u32[]', space=smem, size = 0x4, offset = 0x4, fixed_abs, tag = 'smem constant byte address 0x4 - core index']
  #allocation1 [shape = 'u32[72,128]{1,0:T(1,128)}', space=vmem, size = 0x9000, scoped, tag = 'internal scratch']
  #allocation2 [shape = 'f32[8,128]{1,0:T(8,128)}', space=vmem, size = 0x1000, scoped, tag = 'scratch operand']
  %s0 = inlined_call_operand.vmem [shape: f32[8,32], index: 0, kind: input, shape index: {}]
  %s1 = inlined_call_operand.vmem [shape: f32[32,128], index: 1, kind: input, shape index: {}]
  %s2 = inlined_call_operand.vmem [shape: f32[32,128], index: 2, kind: input, shape index: {}]
  %s3 = inlined_call_operand.vmem [shape: f32[1,128], index: 3, kind: input, shape index: {}]
  %s4 = inlined_call_operand.hbm [shape: f32[8,32], index: 4, kind: output, shape index: {}]
  %s5 = sld [smem:[#allocation0]]
  $region26: #{question_encoding_forward.1} parent=0
    _
  %s7 = ssub.s32 1, %s5
  %s8 = scalar_select 0, %s7, %s5
  $region1: #{question_encoding_forward.1} parent=0
    #allocation3 [shape = 'u8[4096]{0}', space=vmem, size = 0x1000, scoped, tag = 'output window, operand 0, single buffered']
    #allocation4 [shape = 's32[1]{0}', space=sflag, size = 0x4, scoped, tag = 'scoped memory for question_encoding_forward.1']
    %9 = vsyncpa [#allocation4], 0
    // Predicated region
    $region2: #{question_encoding_forward.1} parent=1 // pred_check
      _
    $region3: #{question_encoding_forward.1} parent=1 // pred_check_branch
      %11 = sbr.rel (0) target = $region5
    $region4: #{question_encoding_forward.1} parent=1 // pred_region
      _
    $region5: #{question_encoding_forward.1} parent=1 // pred_fallthru
      _
    // Predicated region
    $region6: #{question_encoding_forward.1} parent=1 // pred_check
      _
    $region7: #{question_encoding_forward.1} parent=1 // pred_check_branch
      %13 = sbr.rel (0) target = $region9
    $region8: #{question_encoding_forward.1} parent=1 // pred_region
      _
    $region9: #{question_encoding_forward.1} parent=1 // pred_fallthru
      _
    // Predicated region
    $region10: #{question_encoding_forward.1} parent=1 // pred_check
      _
    $region11: #{question_encoding_forward.1} parent=1 // pred_check_branch
      %15 = sbr.rel (0) target = $region13
    $region12: #{question_encoding_forward.1} parent=1 // pred_region
      _
    $region13: #{question_encoding_forward.1} parent=1 // pred_fallthru
      _
    // Predicated region
    $region14: #{question_encoding_forward.1} parent=1 // pred_check
      _
    $region15: #{question_encoding_forward.1} parent=1 // pred_check_branch
      %17 = sbr.rel (0) target = $region17
    $region16: #{question_encoding_forward.1} parent=1 // pred_region
      _
    $region17: #{question_encoding_forward.1} parent=1 // pred_fallthru
      _
    %v18 = vld [vmem:[%s0] sm:$0xff]
    %v19 = vld [vmem:[%s1] sm:$0xff]
    %v20 = vld [vmem:[%s1 + $0x8] sm:$0xff]
    %v21 = vld [vmem:[%s1 + $0x10] sm:$0xff]
    %v22 = vld [vmem:[%s1 + $0x18] sm:$0xff]
    %v23 = vld [vmem:[%s3] sm:$0x1]
    %v25 = vperm.slane %v23, 0
    %vm27 = vcmask 261120
    %v29 = vsel %vm27, %v18, 0
    %31 = vmatpush.msra.mxu0 0.0
    %32 = vmatpush.msra.mxu0 0.0
    %33 = vmatpush.msra.mxu0 0.0
    %34 = vmatpush.msra.mxu0 0.0
    %35 = vmatpush.msra.mxu0 0.0
    %36 = vmatpush.msra.mxu0 0.0
    %37 = vmatpush.msra.mxu0 0.0
    %38 = vmatpush.msra.mxu0 0.0
    %39 = vmatpush.msra.mxu0 0.0
    %40 = vmatpush.msra.mxu0 0.0
    %41 = vmatpush.msra.mxu0 0.0
    %42 = vmatpush.msra.mxu0 0.0
    %43 = vmatpush.msra.mxu0 %v22
    %44 = vmatpush.msra.mxu0 %v21
    %45 = vmatpush.msra.mxu0 %v20
    %46 = vmatpush.msra.mxu0 %v19
    %47 = vmatmul.f32.gmra.mxu0 %v29
    %v48 = vpop.f32.mrf.mxu0
    %v49 = vadd.f32 %v25, %v48
    %50 = vdwg.mxu0
    %51 = vst [vmem:[#allocation2] sm:$0xff] %v49
    %v52 = vld [vmem:[%s2] sm:$0xff]
    %v53 = vld [vmem:[%s2 + $0x8] sm:$0xff]
    %v54 = vld [vmem:[%s2 + $0x10] sm:$0xff]
    %v55 = vld [vmem:[%s2 + $0x18] sm:$0xff]
    %v56 = vlaneseq
    %v57 = vand.u32 %v56, 127
    %vm58 = vcmp.lt.s32.totalorder %v57, 0
    %v59 = vsub.s32 0, %v57
    %v60 = vsel %vm58, %v59, %v57
    %v61 = vshrl.u32 %v60, 5
    %v62 = vand.u32 %v60, 31
    %v63 = vsub.s32 0, %v62
    %v64 = vsel %vm58, %v63, %v62
    %vm65 = vcmp.ne.s32.totalorder %v64, 0
    %vm66 = vcmp.lt.s32.totalorder %v64, 0
    %vm67 = vmand %vm66, %vm65
    %v68 = vadd.s32 %v64, 32
    %v69 = vsel %vm67, %v68, %v64
    %vm70 = vcmp.lt.s32.totalorder %v69, 16
    %vm71 = vcmp.ge.s32.totalorder %v57, 64
    %vm72 = vcmp.lt.s32.totalorder %v57, 96
    %vm73 = vmand %vm71, %vm72
    %v74 = vsel %vm73, 1.0, 0.5
    %v75 = vld [vmem:[#allocation2] sm:$0x1]
    %v76 = vld [vmem:[#allocation2 + $0x7] sm:$0x1]
    %v77 = vsel %vm70, %v75, %v76
    %v79 = vsel %vm27, 0.0, 0
    %81 = vmatpush.msra.mxu0 0.0
    %82 = vmatpush.msra.mxu0 0.0
    %83 = vmatpush.msra.mxu0 0.0
    %84 = vmatpush.msra.mxu0 0.0
    %85 = vmatpush.msra.mxu0 0.0
    %86 = vmatpush.msra.mxu0 0.0
    %87 = vmatpush.msra.mxu0 0.0
    %88 = vmatpush.msra.mxu0 0.0
    %89 = vmatpush.msra.mxu0 0.0
    %90 = vmatpush.msra.mxu0 0.0
    %91 = vmatpush.msra.mxu0 0.0
    %92 = vmatpush.msra.mxu0 0.0
    %93 = vmatpush.msra.mxu0 %v55
    %94 = vmatpush.msra.mxu0 %v54
    %95 = vmatpush.msra.mxu0 %v53
    %96 = vmatpush.msra.mxu0 %v52
    %97 = vmatmul.f32.gmra.mxu0 %v79
    %v98 = vpop.f32.mrf.mxu0
    %v99 = vadd.f32 0.0, %v98
    %100 = vdwg.mxu0
    %v101 = vadd.f32 %v77, %v99
    %v102 = vmul.f32 %v101, %v74
    %v103 = vtanh.pop %v102
    %v104 = vmul.f32 %v103, 0.5
    %v105 = vadd.f32 %v104, 0.5
    %v106 = vmul.f32 %v105, 0.0
    %108 = vrot.lane.b32.xlu0 %v103, 64
    %v109 = vpop.permute.xlu0 %108
    %v111 = vmul.f32 %v105, %v109
    %113 = vrot.lane.b32.xlu0 %v111, 32
    %v114 = vpop.permute.xlu0 %113
    %v116 = vadd.f32 %v106, %v114
    %v117 = vtanh.pop %v116
    %119 = vrot.lane.b32.xlu0 %v117, 64
    %v120 = vpop.permute.xlu0 %119
    %v122 = vmul.f32 %v105, %v120
    %124 = vrot.lane.b32.xlu0 %v122, 32
    %v125 = vpop.permute.xlu0 %124
    %vm127 = vcmask 122880
    %128 = vst.msk [vmem:[#allocation3] sm:$0x1] %vm127, %v125
    %vm129 = vcmask 254080
    %130 = vst.msk [vmem:[#allocation3 + $0x7] sm:$0x1] %vm129, %v125
    %v131 = vld [vmem:[#allocation2 + $0x1] sm:$0x1]
    %v132 = vld [vmem:[#allocation2 + $0x6] sm:$0x1]
    %v133 = vsel %vm70, %v131, %v132
    %v134 = vsel %vm27, %v125, 0
    %136 = vmatpush.msra.mxu0 0.0
    %137 = vmatpush.msra.mxu0 0.0
    %138 = vmatpush.msra.mxu0 0.0
    %139 = vmatpush.msra.mxu0 0.0
    %140 = vmatpush.msra.mxu0 0.0
    %141 = vmatpush.msra.mxu0 0.0
    %142 = vmatpush.msra.mxu0 0.0
    %143 = vmatpush.msra.mxu0 0.0
    %144 = vmatpush.msra.mxu0 0.0
    %145 = vmatpush.msra.mxu0 0.0
    %146 = vmatpush.msra.mxu0 0.0
    %147 = vmatpush.msra.mxu0 0.0
    %148 = vmatpush.msra.mxu0 %v55
    %149 = vmatpush.msra.mxu0 %v54
    %150 = vmatpush.msra.mxu0 %v53
    %151 = vmatpush.msra.mxu0 %v52
    %152 = vmatmul.f32.gmra.mxu0 %v134
    %v153 = vpop.f32.mrf.mxu0
    %v154 = vadd.f32 0.0, %v153
    %155 = vdwg.mxu0
    %v156 = vadd.f32 %v133, %v154
    %v157 = vmul.f32 %v156, %v74
    %v158 = vtanh.pop %v157
    %v159 = vmul.f32 %v158, 0.5
    %v160 = vadd.f32 %v159, 0.5
    %v161 = vmul.f32 %v160, %v116
    %163 = vrot.lane.b32.xlu0 %v158, 64
    %v164 = vpop.permute.xlu0 %163
    %v166 = vmul.f32 %v160, %v164
    %168 = vrot.lane.b32.xlu0 %v166, 32
    %v169 = vpop.permute.xlu0 %168
    %v171 = vadd.f32 %v161, %v169
    %v172 = vtanh.pop %v171
    %174 = vrot.lane.b32.xlu0 %v172, 64
    %v175 = vpop.permute.xlu0 %174
    %v177 = vmul.f32 %v160, %v175
    %179 = vrot.lane.b32.xlu0 %v177, 32
    %v180 = vpop.permute.xlu0 %179
    %182 = vst.msk [vmem:[#allocation3 + $0x1] sm:$0x1] %vm127, %v180
    %183 = vst.msk [vmem:[#allocation3 + $0x6] sm:$0x1] %vm129, %v180
    %v184 = vld [vmem:[#allocation2 + $0x2] sm:$0x1]
    %v185 = vld [vmem:[#allocation2 + $0x5] sm:$0x1]
    %v186 = vsel %vm70, %v184, %v185
    %v187 = vsel %vm27, %v180, 0
    %189 = vmatpush.msra.mxu0 0.0
    %190 = vmatpush.msra.mxu0 0.0
    %191 = vmatpush.msra.mxu0 0.0
    %192 = vmatpush.msra.mxu0 0.0
    %193 = vmatpush.msra.mxu0 0.0
    %194 = vmatpush.msra.mxu0 0.0
    %195 = vmatpush.msra.mxu0 0.0
    %196 = vmatpush.msra.mxu0 0.0
    %197 = vmatpush.msra.mxu0 0.0
    %198 = vmatpush.msra.mxu0 0.0
    %199 = vmatpush.msra.mxu0 0.0
    %200 = vmatpush.msra.mxu0 0.0
    %201 = vmatpush.msra.mxu0 %v55
    %202 = vmatpush.msra.mxu0 %v54
    %203 = vmatpush.msra.mxu0 %v53
    %204 = vmatpush.msra.mxu0 %v52
    %205 = vmatmul.f32.gmra.mxu0 %v187
    %v206 = vpop.f32.mrf.mxu0
    %v207 = vadd.f32 0.0, %v206
    %208 = vdwg.mxu0
    %v209 = vadd.f32 %v186, %v207
    %v210 = vmul.f32 %v209, %v74
    %v211 = vtanh.pop %v210
    %v212 = vmul.f32 %v211, 0.5
    %v213 = vadd.f32 %v212, 0.5
    %v214 = vmul.f32 %v213, %v171
    %216 = vrot.lane.b32.xlu0 %v211, 64
    %v217 = vpop.permute.xlu0 %216
    %v219 = vmul.f32 %v213, %v217
    %221 = vrot.lane.b32.xlu0 %v219, 32
    %v222 = vpop.permute.xlu0 %221
    %v224 = vadd.f32 %v214, %v222
    %v225 = vtanh.pop %v224
    %227 = vrot.lane.b32.xlu0 %v225, 64
    %v228 = vpop.permute.xlu0 %227
    %v230 = vmul.f32 %v213, %v228
    %232 = vrot.lane.b32.xlu0 %v230, 32
    %v233 = vpop.permute.xlu0 %232
    %235 = vst.msk [vmem:[#allocation3 + $0x2] sm:$0x1] %vm127, %v233
    %236 = vst.msk [vmem:[#allocation3 + $0x5] sm:$0x1] %vm129, %v233
    %v237 = vld [vmem:[#allocation2 + $0x3] sm:$0x1]
    %v238 = vld [vmem:[#allocation2 + $0x4] sm:$0x1]
    %v239 = vsel %vm70, %v237, %v238
    %v240 = vsel %vm27, %v233, 0
    %242 = vmatpush.msra.mxu0 0.0
    %243 = vmatpush.msra.mxu0 0.0
    %244 = vmatpush.msra.mxu0 0.0
    %245 = vmatpush.msra.mxu0 0.0
    %246 = vmatpush.msra.mxu0 0.0
    %247 = vmatpush.msra.mxu0 0.0
    %248 = vmatpush.msra.mxu0 0.0
    %249 = vmatpush.msra.mxu0 0.0
    %250 = vmatpush.msra.mxu0 0.0
    %251 = vmatpush.msra.mxu0 0.0
    %252 = vmatpush.msra.mxu0 0.0
    %253 = vmatpush.msra.mxu0 0.0
    %254 = vmatpush.msra.mxu0 %v55
    %255 = vmatpush.msra.mxu0 %v54
    %256 = vmatpush.msra.mxu0 %v53
    %257 = vmatpush.msra.mxu0 %v52
    %258 = vmatmul.f32.gmra.mxu0 %v240
    %v259 = vpop.f32.mrf.mxu0
    %v260 = vadd.f32 0.0, %v259
    %261 = vdwg.mxu0
    %v262 = vadd.f32 %v239, %v260
    %v263 = vmul.f32 %v262, %v74
    %v264 = vtanh.pop %v263
    %v265 = vmul.f32 %v264, 0.5
    %v266 = vadd.f32 %v265, 0.5
    %v267 = vmul.f32 %v266, %v224
    %269 = vrot.lane.b32.xlu0 %v264, 64
    %v270 = vpop.permute.xlu0 %269
    %v272 = vmul.f32 %v266, %v270
    %274 = vrot.lane.b32.xlu0 %v272, 32
    %v275 = vpop.permute.xlu0 %274
    %v277 = vadd.f32 %v267, %v275
    %v278 = vtanh.pop %v277
    %280 = vrot.lane.b32.xlu0 %v278, 64
    %v281 = vpop.permute.xlu0 %280
    %v283 = vmul.f32 %v266, %v281
    %285 = vrot.lane.b32.xlu0 %v283, 32
    %v286 = vpop.permute.xlu0 %285
    %288 = vst.msk [vmem:[#allocation3 + $0x3] sm:$0x1] %vm127, %v286
    %289 = vst.msk [vmem:[#allocation3 + $0x4] sm:$0x1] %vm129, %v286
    %v290 = vld [vmem:[#allocation2 + $0x4] sm:$0x1]
    %v291 = vld [vmem:[#allocation2 + $0x3] sm:$0x1]
    %v292 = vsel %vm70, %v290, %v291
    %v293 = vsel %vm27, %v286, 0
    %295 = vmatpush.msra.mxu0 0.0
    %296 = vmatpush.msra.mxu0 0.0
    %297 = vmatpush.msra.mxu0 0.0
    %298 = vmatpush.msra.mxu0 0.0
    %299 = vmatpush.msra.mxu0 0.0
    %300 = vmatpush.msra.mxu0 0.0
    %301 = vmatpush.msra.mxu0 0.0
    %302 = vmatpush.msra.mxu0 0.0
    %303 = vmatpush.msra.mxu0 0.0
    %304 = vmatpush.msra.mxu0 0.0
    %305 = vmatpush.msra.mxu0 0.0
    %306 = vmatpush.msra.mxu0 0.0
    %307 = vmatpush.msra.mxu0 %v55
    %308 = vmatpush.msra.mxu0 %v54
    %309 = vmatpush.msra.mxu0 %v53
    %310 = vmatpush.msra.mxu0 %v52
    %311 = vmatmul.f32.gmra.mxu0 %v293
    %v312 = vpop.f32.mrf.mxu0
    %v313 = vadd.f32 0.0, %v312
    %314 = vdwg.mxu0
    %v315 = vadd.f32 %v292, %v313
    %v316 = vmul.f32 %v315, %v74
    %v317 = vtanh.pop %v316
    %v318 = vmul.f32 %v317, 0.5
    %v319 = vadd.f32 %v318, 0.5
    %v320 = vmul.f32 %v319, %v277
    %322 = vrot.lane.b32.xlu0 %v317, 64
    %v323 = vpop.permute.xlu0 %322
    %v325 = vmul.f32 %v319, %v323
    %327 = vrot.lane.b32.xlu0 %v325, 32
    %v328 = vpop.permute.xlu0 %327
    %v330 = vadd.f32 %v320, %v328
    %v331 = vtanh.pop %v330
    %333 = vrot.lane.b32.xlu0 %v331, 64
    %v334 = vpop.permute.xlu0 %333
    %v336 = vmul.f32 %v319, %v334
    %338 = vrot.lane.b32.xlu0 %v336, 32
    %v339 = vpop.permute.xlu0 %338
    %341 = vst.msk [vmem:[#allocation3 + $0x4] sm:$0x1] %vm127, %v339
    %342 = vst.msk [vmem:[#allocation3 + $0x3] sm:$0x1] %vm129, %v339
    %v343 = vld [vmem:[#allocation2 + $0x5] sm:$0x1]
    %v344 = vld [vmem:[#allocation2 + $0x2] sm:$0x1]
    %v345 = vsel %vm70, %v343, %v344
    %v346 = vsel %vm27, %v339, 0
    %348 = vmatpush.msra.mxu0 0.0
    %349 = vmatpush.msra.mxu0 0.0
    %350 = vmatpush.msra.mxu0 0.0
    %351 = vmatpush.msra.mxu0 0.0
    %352 = vmatpush.msra.mxu0 0.0
    %353 = vmatpush.msra.mxu0 0.0
    %354 = vmatpush.msra.mxu0 0.0
    %355 = vmatpush.msra.mxu0 0.0
    %356 = vmatpush.msra.mxu0 0.0
    %357 = vmatpush.msra.mxu0 0.0
    %358 = vmatpush.msra.mxu0 0.0
    %359 = vmatpush.msra.mxu0 0.0
    %360 = vmatpush.msra.mxu0 %v55
    %361 = vmatpush.msra.mxu0 %v54
    %362 = vmatpush.msra.mxu0 %v53
    %363 = vmatpush.msra.mxu0 %v52
    %364 = vmatmul.f32.gmra.mxu0 %v346
    %v365 = vpop.f32.mrf.mxu0
    %v366 = vadd.f32 0.0, %v365
    %367 = vdwg.mxu0
    %v368 = vadd.f32 %v345, %v366
    %v369 = vmul.f32 %v368, %v74
    %v370 = vtanh.pop %v369
    %v371 = vmul.f32 %v370, 0.5
    %v372 = vadd.f32 %v371, 0.5
    %v373 = vmul.f32 %v372, %v330
    %375 = vrot.lane.b32.xlu0 %v370, 64
    %v376 = vpop.permute.xlu0 %375
    %v378 = vmul.f32 %v372, %v376
    %380 = vrot.lane.b32.xlu0 %v378, 32
    %v381 = vpop.permute.xlu0 %380
    %v383 = vadd.f32 %v373, %v381
    %v384 = vtanh.pop %v383
    %386 = vrot.lane.b32.xlu0 %v384, 64
    %v387 = vpop.permute.xlu0 %386
    %v389 = vmul.f32 %v372, %v387
    %391 = vrot.lane.b32.xlu0 %v389, 32
    %v392 = vpop.permute.xlu0 %391
    %394 = vst.msk [vmem:[#allocation3 + $0x5] sm:$0x1] %vm127, %v392
    %395 = vst.msk [vmem:[#allocation3 + $0x2] sm:$0x1] %vm129, %v392
    %v396 = vld [vmem:[#allocation2 + $0x6] sm:$0x1]
    %v397 = vld [vmem:[#allocation2 + $0x1] sm:$0x1]
    %v398 = vsel %vm70, %v396, %v397
    %v399 = vsel %vm27, %v392, 0
    %401 = vmatpush.msra.mxu0 0.0
    %402 = vmatpush.msra.mxu0 0.0
    %403 = vmatpush.msra.mxu0 0.0
    %404 = vmatpush.msra.mxu0 0.0
    %405 = vmatpush.msra.mxu0 0.0
    %406 = vmatpush.msra.mxu0 0.0
    %407 = vmatpush.msra.mxu0 0.0
    %408 = vmatpush.msra.mxu0 0.0
    %409 = vmatpush.msra.mxu0 0.0
    %410 = vmatpush.msra.mxu0 0.0
    %411 = vmatpush.msra.mxu0 0.0
    %412 = vmatpush.msra.mxu0 0.0
    %413 = vmatpush.msra.mxu0 %v55
    %414 = vmatpush.msra.mxu0 %v54
    %415 = vmatpush.msra.mxu0 %v53
    %416 = vmatpush.msra.mxu0 %v52
    %417 = vmatmul.f32.gmra.mxu0 %v399
    %v418 = vpop.f32.mrf.mxu0
    %v419 = vadd.f32 0.0, %v418
    %420 = vdwg.mxu0
    %v421 = vadd.f32 %v398, %v419
    %v422 = vmul.f32 %v421, %v74
    %v423 = vtanh.pop %v422
    %v424 = vmul.f32 %v423, 0.5
    %v425 = vadd.f32 %v424, 0.5
    %v426 = vmul.f32 %v425, %v383
    %428 = vrot.lane.b32.xlu0 %v423, 64
    %v429 = vpop.permute.xlu0 %428
    %v431 = vmul.f32 %v425, %v429
    %433 = vrot.lane.b32.xlu0 %v431, 32
    %v434 = vpop.permute.xlu0 %433
    %v436 = vadd.f32 %v426, %v434
    %v437 = vtanh.pop %v436
    %439 = vrot.lane.b32.xlu0 %v437, 64
    %v440 = vpop.permute.xlu0 %439
    %v442 = vmul.f32 %v425, %v440
    %444 = vrot.lane.b32.xlu0 %v442, 32
    %v445 = vpop.permute.xlu0 %444
    %447 = vst.msk [vmem:[#allocation3 + $0x6] sm:$0x1] %vm127, %v445
    %448 = vst.msk [vmem:[#allocation3 + $0x1] sm:$0x1] %vm129, %v445
    %v449 = vld [vmem:[#allocation2 + $0x7] sm:$0x1]
    %v450 = vld [vmem:[#allocation2] sm:$0x1]
    %v451 = vsel %vm70, %v449, %v450
    %v452 = vsel %vm27, %v445, 0
    %454 = vmatpush.msra.mxu0 0.0
    %455 = vmatpush.msra.mxu0 0.0
    %456 = vmatpush.msra.mxu0 0.0
    %457 = vmatpush.msra.mxu0 0.0
    %458 = vmatpush.msra.mxu0 0.0
    %459 = vmatpush.msra.mxu0 0.0
    %460 = vmatpush.msra.mxu0 0.0
    %461 = vmatpush.msra.mxu0 0.0
    %462 = vmatpush.msra.mxu0 0.0
    %463 = vmatpush.msra.mxu0 0.0
    %464 = vmatpush.msra.mxu0 0.0
    %465 = vmatpush.msra.mxu0 0.0
    %466 = vmatpush.msra.mxu0 %v55
    %467 = vmatpush.msra.mxu0 %v54
    %468 = vmatpush.msra.mxu0 %v53
    %469 = vmatpush.msra.mxu0 %v52
    %470 = vmatmul.f32.gmra.mxu0 %v452
    %v471 = vpop.f32.mrf.mxu0
    %v472 = vadd.f32 0.0, %v471
    %473 = vdwg.mxu0
    %v474 = vadd.f32 %v451, %v472
    %v475 = vmul.f32 %v474, %v74
    %v476 = vtanh.pop %v475
    %v477 = vmul.f32 %v476, 0.5
    %v478 = vadd.f32 %v477, 0.5
    %v479 = vmul.f32 %v478, %v436
    %481 = vrot.lane.b32.xlu0 %v476, 64
    %v482 = vpop.permute.xlu0 %481
    %v484 = vmul.f32 %v478, %v482
    %486 = vrot.lane.b32.xlu0 %v484, 32
    %v487 = vpop.permute.xlu0 %486
    %v489 = vadd.f32 %v479, %v487
    %v490 = vtanh.pop %v489
    %492 = vrot.lane.b32.xlu0 %v490, 64
    %v493 = vpop.permute.xlu0 %492
    %v495 = vmul.f32 %v478, %v493
    %497 = vrot.lane.b32.xlu0 %v495, 32
    %v498 = vpop.permute.xlu0 %497
    %500 = vst.msk [vmem:[#allocation3 + $0x7] sm:$0x1] %vm127, %v498
    %501 = vst.msk [vmem:[#allocation3] sm:$0x1] %vm129, %v498
    // Predicated region
    $region18: #{question_encoding_forward.1} parent=1 // pred_check
      _
    $region19: #{question_encoding_forward.1} parent=1 // pred_check_branch
      %503 = sbr.rel (0) target = $region21
    $region20: #{question_encoding_forward.1} parent=1 // pred_region
      %505 = vsyncadd [#allocation4], 0
      %s507 = sshll.u32 [#allocation3], 4
      %s508 = int_to_ptr.vmem [resolvable:$true] %s507
      %s509 = sshll.u32 %s4, 4
      %s510 = int_to_ptr.hbm [resolvable:$true] %s509
      %512 = dma.vmem_to_hbm [thread:$0]  %s508, 128, %s510, [#allocation4]
    $region21: #{question_encoding_forward.1} parent=1 // pred_fallthru
      _
    // Predicated region
    $region22: #{question_encoding_forward.1} parent=1 // pred_check
      _
    $region23: #{question_encoding_forward.1} parent=1 // pred_check_branch
      %514 = sbr.rel (0) target = $region25
    $region24: #{question_encoding_forward.1} parent=1 // pred_region
      %516 = dma.done [#allocation4], 128
    $region25: #{question_encoding_forward.1} parent=1 // pred_fallthru
      _
    %517 = vsyncpa [#allocation4], 1

</llo_original>
